<compile_context>
chip_gen: v7x
topology: tpu7x:2x2x1
jax: 0.10.0
libtpu: 0.0.40
codegen_flags: <defaults>
</compile_context>

<pallas_src>
import functools

import jax
import jax.numpy as jnp
from jax.experimental import pallas as pl
from jax.experimental.pallas import tpu as pltpu

LOG_STD_MAX = 2.0
LOG_STD_MIN = -5.0

HIDDEN = 256
OBS_PAD = 128   # fc1 contraction (K) padded to a lane-dense width
ACT_PAD = 128   # each head padded to 128 lanes; fused head output is 2*ACT_PAD


def _round_up(n, m):
    return ((n + m - 1) // m) * m


def actor_kernel(x_ref, w1_ref, b1_ref, w2_ref, b2_ref, wh_ref, bh_ref,
                 out_ref, *, a_pad):
    # fc1 + relu  (bf16 MXU inputs, f32 accumulation)
    h = jnp.dot(x_ref[...], w1_ref[...], preferred_element_type=jnp.float32)
    h = jnp.maximum(h + b1_ref[...], 0.0)
    # fc2 + relu
    h = jnp.dot(h.astype(jnp.bfloat16), w2_ref[...],
                preferred_element_type=jnp.float32)
    h = jnp.maximum(h + b2_ref[...], 0.0)
    # fused heads: one 256x256 matmul -> [mean | logstd_raw]
    y = jnp.dot(h.astype(jnp.bfloat16), wh_ref[...],
                preferred_element_type=jnp.float32) + bh_ref[...]
    mean = y[:, :a_pad]
    ls = jnp.tanh(y[:, a_pad:])
    ls = LOG_STD_MIN + 0.5 * (LOG_STD_MAX - LOG_STD_MIN) * (ls + 1.0)
    # single lane-dense (TB, 2*a_pad) store
    out_ref[...] = jnp.concatenate([mean, ls], axis=-1)


@functools.partial(jax.jit, static_argnames=("act_dim",))
def actor_forward(x, params, act_dim):
    """Runs the Actor forward pass. Returns (mean, log_std), each (B, act_dim)."""
    w1, b1, w2, b2, wh, bh = params
    B, obs = x.shape
    obs_pad = w1.shape[0]
    a2 = wh.shape[1]        # 2 * padded action dim
    a_pad = a2 // 2

    # Batch tile: full batch for small B (kept a multiple of 8 sublanes),
    # 512-row tiles for large B (re-derive against 64 MiB VMEM on v7x: weights
    # ~0.3 MB bf16 + double-buffered x/out tiles stay far under the limit).
    if B <= 512:
        tb = _round_up(B, 8)
    else:
        tb = 512
    b_pad = _round_up(B, tb)

    # Pad batch to a tile multiple and obs to a lane-dense K; bf16 MXU operands.
    x_p = jnp.pad(x, ((0, b_pad - B), (0, obs_pad - obs))).astype(jnp.bfloat16)
    w1b = w1.astype(jnp.bfloat16)
    w2b = w2.astype(jnp.bfloat16)
    whb = wh.astype(jnp.bfloat16)

    flops = 2 * b_pad * (obs_pad * HIDDEN + HIDDEN * HIDDEN + HIDDEN * a2)
    bytes_accessed = ((x_p.size + w1b.size + w2b.size + whb.size) * 2
                      + (b1.size + b2.size + bh.size) * 4
                      + b_pad * a2 * 4)

    out = pl.pallas_call(
        functools.partial(actor_kernel, a_pad=a_pad),
        out_shape=jax.ShapeDtypeStruct((b_pad, a2), jnp.float32),
        grid=(b_pad // tb,),
        in_specs=[
            pl.BlockSpec((tb, obs_pad), lambda i: (i, 0)),       # x tile
            pl.BlockSpec((obs_pad, HIDDEN), lambda i: (0, 0)),   # w1 (resident)
            pl.BlockSpec((1, HIDDEN), lambda i: (0, 0)),         # b1
            pl.BlockSpec((HIDDEN, HIDDEN), lambda i: (0, 0)),    # w2
            pl.BlockSpec((1, HIDDEN), lambda i: (0, 0)),         # b2
            pl.BlockSpec((HIDDEN, a2), lambda i: (0, 0)),        # fused head W
            pl.BlockSpec((1, a2), lambda i: (0, 0)),             # fused head b
        ],
        out_specs=pl.BlockSpec((tb, a2), lambda i: (i, 0)),
        compiler_params=pltpu.CompilerParams(
            dimension_semantics=("parallel",)),
        cost_estimate=pl.CostEstimate(
            flops=flops,
            transcendentals=b_pad * a_pad,
            bytes_accessed=bytes_accessed),
    )(x_p, w1b, b1, w2b, b2, whb, bh)

    mean = out[:B, :act_dim]
    log_std = out[:B, a_pad:a_pad + act_dim]
    return mean, log_std


def init_actor_params(key, obs_dim, act_dim, obs_pad=OBS_PAD, act_pad=ACT_PAD):
    """Deterministic synthetic parameters matching the PyTorch module's shapes.

    fc1: (obs_dim, 256), fc2: (256, 256), fc_mean/fc_logstd: (256, act_dim).
    fc1's K dim is zero-padded to obs_pad; the two heads are fused into a
    single (256, 2*act_pad) weight [mean | logstd], each padded to act_pad.
    """
    ks = jax.random.split(key, 8)

    def linear(kw, kb, fan_in, fan_out):
        bound = 1.0 / jnp.sqrt(fan_in)
        w = jax.random.uniform(kw, (fan_in, fan_out), jnp.float32, -bound, bound)
        b = jax.random.uniform(kb, (1, fan_out), jnp.float32, -bound, bound)
        return w, b

    w1, b1 = linear(ks[0], ks[1], obs_dim, HIDDEN)
    w2, b2 = linear(ks[2], ks[3], HIDDEN, HIDDEN)
    wm, bm = linear(ks[4], ks[5], HIDDEN, act_dim)
    ws, bs = linear(ks[6], ks[7], HIDDEN, act_dim)

    # zero-pad fc1's contraction dim so x/w1 are lane-dense
    w1 = jnp.pad(w1, ((0, obs_pad - obs_dim), (0, 0)))

    # fuse heads: [mean | logstd], each zero-padded to act_pad lanes
    pad_a = act_pad - act_dim
    wh = jnp.concatenate([jnp.pad(wm, ((0, 0), (0, pad_a))),
                          jnp.pad(ws, ((0, 0), (0, pad_a)))], axis=1)
    bh = jnp.concatenate([jnp.pad(bm, ((0, 0), (0, pad_a))),
                          jnp.pad(bs, ((0, 0), (0, pad_a)))], axis=1)
    return (w1, b1, w2, b2, wh, bh)


def actor_forward_ref(x, params, act_dim):
    """Pure-JAX reference (emulates the kernel's bf16 MXU inputs)."""
    w1, b1, w2, b2, wh, bh = params
    obs = x.shape[1]
    a_pad = wh.shape[1] // 2
    bf = lambda a: a.astype(jnp.bfloat16).astype(jnp.float32)
    h = jnp.maximum(bf(x) @ bf(w1[:obs]) + b1, 0.0)
    h = jnp.maximum(bf(h) @ bf(w2) + b2, 0.0)
    y = bf(h) @ bf(wh) + bh
    mean = y[:, :act_dim]
    ls = jnp.tanh(y[:, a_pad:a_pad + act_dim])
    ls = LOG_STD_MIN + 0.5 * (LOG_STD_MAX - LOG_STD_MIN) * (ls + 1.0)
    return mean, ls


# TODO(synk): get_action() (rsample + log_prob of a tanh-squashed Normal and the
# action_scale/action_bias rescale) is stochastic sampling glue and is
# intentionally left outside the kernel.

if __name__ == "__main__":
    key = jax.random.PRNGKey(0)
    k_param, k_x = jax.random.split(key)

    B, OBS_DIM, ACT_DIM = 8, 32, 2  # small shapes consistent with the module
    params = init_actor_params(k_param, OBS_DIM, ACT_DIM)
    x = jax.random.normal(k_x, (B, OBS_DIM), jnp.float32)

    mean, log_std = actor_forward(x, params, ACT_DIM)
    jax.block_until_ready((mean, log_std))

    mean_ref, log_std_ref = actor_forward_ref(x, params, ACT_DIM)
    assert mean.shape == (B, ACT_DIM) and log_std.shape == (B, ACT_DIM)
    assert jnp.allclose(mean, mean_ref, atol=2e-2, rtol=2e-2)
    assert jnp.allclose(log_std, log_std_ref, atol=2e-2, rtol=2e-2)
    assert bool(jnp.all(log_std >= LOG_STD_MIN)) and bool(jnp.all(log_std <= LOG_STD_MAX))

    print("KERNEL_OK")
</pallas_src>

<mosaic_0001>
module attributes {stable_mosaic.version = 11 : i64} {
  func.func @actor_kernel(%arg0: i32, %arg1: memref<8x128xbf16, #tpu.memory_space<vmem>>, %arg2: memref<128x256xbf16, #tpu.memory_space<vmem>>, %arg3: memref<1x256xf32, #tpu.memory_space<vmem>>, %arg4: memref<256x256xbf16, #tpu.memory_space<vmem>>, %arg5: memref<1x256xf32, #tpu.memory_space<vmem>>, %arg6: memref<256x256xbf16, #tpu.memory_space<vmem>>, %arg7: memref<1x256xf32, #tpu.memory_space<vmem>>, %arg8: memref<8x256xf32, #tpu.memory_space<vmem>>) attributes {dimension_semantics = [#tpu.dimension_semantics<parallel>], iteration_bounds = array<i64: 1>, scalar_prefetch = 0 : i64, scratch_operands = 0 : i64, tpu.core_type = #tpu.core_type<tc>, window_params = [{transform_indices = @transform_0, window_bounds = array<i64: 8, 128>}, {pipeline_mode = #tpu.pipeline_mode<synchronous>, transform_indices = @transform_1, window_bounds = array<i64: 128, 256>}, {pipeline_mode = #tpu.pipeline_mode<synchronous>, transform_indices = @transform_2, window_bounds = array<i64: 1, 256>}, {pipeline_mode = #tpu.pipeline_mode<synchronous>, transform_indices = @transform_3, window_bounds = array<i64: 256, 256>}, {pipeline_mode = #tpu.pipeline_mode<synchronous>, transform_indices = @transform_4, window_bounds = array<i64: 1, 256>}, {pipeline_mode = #tpu.pipeline_mode<synchronous>, transform_indices = @transform_5, window_bounds = array<i64: 256, 256>}, {pipeline_mode = #tpu.pipeline_mode<synchronous>, transform_indices = @transform_6, window_bounds = array<i64: 1, 256>}, {transform_indices = @transform_7, window_bounds = array<i64: 8, 256>}]} {
    %c0 = arith.constant 0 : index
    %c0_0 = arith.constant 0 : index
    %0 = vector.load %arg1[%c0, %c0_0] : memref<8x128xbf16, #tpu.memory_space<vmem>>, vector<8x128xbf16>
    %c0_1 = arith.constant 0 : index
    %c0_2 = arith.constant 0 : index
    %1 = vector.load %arg2[%c0_1, %c0_2] : memref<128x256xbf16, #tpu.memory_space<vmem>>, vector<128x256xbf16>
    %cst = arith.constant dense<0.000000e+00> : vector<8x256xf32>
    %2 = tpu.matmul %0, %1, %cst {dimension_numbers = #tpu.dot_dimension_numbers<[1], [0], [0], [1], [0, 0, 1, 1], [], []>} : vector<8x128xbf16>, vector<128x256xbf16>, vector<8x256xf32> -> vector<8x256xf32>
    %c0_3 = arith.constant 0 : index
    %c0_4 = arith.constant 0 : index
    %3 = vector.load %arg3[%c0_3, %c0_4] : memref<1x256xf32, #tpu.memory_space<vmem>>, vector<1x256xf32>
    %4 = vector.broadcast %3 : vector<1x256xf32> to vector<8x256xf32>
    %5 = arith.addf %2, %4 : vector<8x256xf32>
    %cst_5 = arith.constant 0.000000e+00 : f32
    %6 = vector.broadcast %cst_5 : f32 to vector<8x256xf32>
    %7 = arith.maximumf %5, %6 : vector<8x256xf32>
    %8 = arith.truncf %7 : vector<8x256xf32> to vector<8x256xbf16>
    %c0_6 = arith.constant 0 : index
    %c0_7 = arith.constant 0 : index
    %9 = vector.load %arg4[%c0_6, %c0_7] : memref<256x256xbf16, #tpu.memory_space<vmem>>, vector<256x256xbf16>
    %cst_8 = arith.constant dense<0.000000e+00> : vector<8x256xf32>
    %10 = tpu.matmul %8, %9, %cst_8 {dimension_numbers = #tpu.dot_dimension_numbers<[1], [0], [0], [1], [0, 0, 1, 1], [], []>} : vector<8x256xbf16>, vector<256x256xbf16>, vector<8x256xf32> -> vector<8x256xf32>
    %c0_9 = arith.constant 0 : index
    %c0_10 = arith.constant 0 : index
    %11 = vector.load %arg5[%c0_9, %c0_10] : memref<1x256xf32, #tpu.memory_space<vmem>>, vector<1x256xf32>
    %12 = vector.broadcast %11 : vector<1x256xf32> to vector<8x256xf32>
    %13 = arith.addf %10, %12 : vector<8x256xf32>
    %cst_11 = arith.constant 0.000000e+00 : f32
    %14 = vector.broadcast %cst_11 : f32 to vector<8x256xf32>
    %15 = arith.maximumf %13, %14 : vector<8x256xf32>
    %16 = arith.truncf %15 : vector<8x256xf32> to vector<8x256xbf16>
    %c0_12 = arith.constant 0 : index
    %c0_13 = arith.constant 0 : index
    %17 = vector.load %arg6[%c0_12, %c0_13] : memref<256x256xbf16, #tpu.memory_space<vmem>>, vector<256x256xbf16>
    %cst_14 = arith.constant dense<0.000000e+00> : vector<8x256xf32>
    %18 = tpu.matmul %16, %17, %cst_14 {dimension_numbers = #tpu.dot_dimension_numbers<[1], [0], [0], [1], [0, 0, 1, 1], [], []>} : vector<8x256xbf16>, vector<256x256xbf16>, vector<8x256xf32> -> vector<8x256xf32>
    %c0_15 = arith.constant 0 : index
    %c0_16 = arith.constant 0 : index
    %19 = vector.load %arg7[%c0_15, %c0_16] : memref<1x256xf32, #tpu.memory_space<vmem>>, vector<1x256xf32>
    %20 = vector.broadcast %19 : vector<1x256xf32> to vector<8x256xf32>
    %21 = arith.addf %18, %20 : vector<8x256xf32>
    %22 = vector.extract_strided_slice %21 {offsets = [0, 0], sizes = [8, 128], strides = [1, 1]} : vector<8x256xf32> to vector<8x128xf32>
    %23 = vector.extract_strided_slice %21 {offsets = [0, 128], sizes = [8, 128], strides = [1, 1]} : vector<8x256xf32> to vector<8x128xf32>
    %24 = math.tanh %23 : vector<8x128xf32>
    %cst_17 = arith.constant 1.000000e+00 : f32
    %25 = vector.broadcast %cst_17 : f32 to vector<8x128xf32>
    %26 = arith.addf %24, %25 : vector<8x128xf32>
    %cst_18 = arith.constant 3.500000e+00 : f32
    %27 = vector.broadcast %cst_18 : f32 to vector<8x128xf32>
    %28 = arith.mulf %27, %26 : vector<8x128xf32>
    %cst_19 = arith.constant -5.000000e+00 : f32
    %29 = vector.broadcast %cst_19 : f32 to vector<8x128xf32>
    %30 = arith.addf %29, %28 : vector<8x128xf32>
    %31 = tpu.concatenate %22, %30 in 1 : vector<8x128xf32>, vector<8x128xf32> -> vector<8x256xf32>
    %c0_20 = arith.constant 0 : index
    %c0_21 = arith.constant 0 : index
    %32 = vector.load %arg8[%c0_20, %c0_21] : memref<8x256xf32, #tpu.memory_space<vmem>>, vector<8x256xf32>
    tpu.vector_store %arg8[%c0_20, %c0_21], %31 {strides = array<i32>} : memref<8x256xf32, #tpu.memory_space<vmem>>, vector<8x256xf32>,
    return
  }
  func.func @transform_0(%arg0: i32) -> (i32, i32) {
    %c0_i32 = arith.constant 0 : i32
    %c0_i32_0 = arith.constant 0 : i32
    return %arg0, %c0_i32 : i32, i32
  }
  func.func @transform_1(%arg0: i32) -> (i32, i32) {
    %c0_i32 = arith.constant 0 : i32
    %c0_i32_0 = arith.constant 0 : i32
    %c0_i32_1 = arith.constant 0 : i32
    return %c0_i32, %c0_i32_0 : i32, i32
  }
  func.func @transform_2(%arg0: i32) -> (i32, i32) {
    %c0_i32 = arith.constant 0 : i32
    %c0_i32_0 = arith.constant 0 : i32
    %c0_i32_1 = arith.constant 0 : i32
    return %c0_i32, %c0_i32_0 : i32, i32
  }
  func.func @transform_3(%arg0: i32) -> (i32, i32) {
    %c0_i32 = arith.constant 0 : i32
    %c0_i32_0 = arith.constant 0 : i32
    %c0_i32_1 = arith.constant 0 : i32
    return %c0_i32, %c0_i32_0 : i32, i32
  }
  func.func @transform_4(%arg0: i32) -> (i32, i32) {
    %c0_i32 = arith.constant 0 : i32
    %c0_i32_0 = arith.constant 0 : i32
    %c0_i32_1 = arith.constant 0 : i32
    return %c0_i32, %c0_i32_0 : i32, i32
  }
  func.func @transform_5(%arg0: i32) -> (i32, i32) {
    %c0_i32 = arith.constant 0 : i32
    %c0_i32_0 = arith.constant 0 : i32
    %c0_i32_1 = arith.constant 0 : i32
    return %c0_i32, %c0_i32_0 : i32, i32
  }
  func.func @transform_6(%arg0: i32) -> (i32, i32) {
    %c0_i32 = arith.constant 0 : i32
    %c0_i32_0 = arith.constant 0 : i32
    %c0_i32_1 = arith.constant 0 : i32
    return %c0_i32, %c0_i32_0 : i32, i32
  }
  func.func @transform_7(%arg0: i32) -> (i32, i32) {
    %c0_i32 = arith.constant 0 : i32
    %c0_i32_0 = arith.constant 0 : i32
    return %arg0, %c0_i32 : i32, i32
  }
}

</mosaic_0001>

<llo_original>
// kernel: actor_forward.1
$region0: #{actor_forward.1}
  #allocation0 [shape = 'u32[]', space=smem, size = 0x4, offset = 0x4, fixed_abs, tag = 'smem constant byte address 0x4 - core index']
  #allocation1 [shape = 'u32[144,128]{1,0:T(1,128)}', space=vmem, size = 0x12000, scoped, tag = 'internal scratch']
  %s0 = inlined_call_operand.vmem [shape: bf16[8,128], index: 0, kind: input, shape index: {}]
  %s1 = inlined_call_operand.vmem [shape: bf16[128,256], index: 1, kind: input, shape index: {}]
  %s2 = inlined_call_operand.vmem [shape: f32[1,256], index: 2, kind: input, shape index: {}]
  %s3 = inlined_call_operand.vmem [shape: bf16[256,256], index: 3, kind: input, shape index: {}]
  %s4 = inlined_call_operand.vmem [shape: f32[1,256], index: 4, kind: input, shape index: {}]
  %s5 = inlined_call_operand.vmem [shape: bf16[256,256], index: 5, kind: input, shape index: {}]
  %s6 = inlined_call_operand.vmem [shape: f32[1,256], index: 6, kind: input, shape index: {}]
  %s7 = inlined_call_operand.vmem [shape: f32[8,256], index: 7, kind: output, shape index: {}]
  %s8 = sld [smem:[#allocation0]]
  $region38: #{actor_forward.1} parent=0
    _
  %s10 = ssub.s32 1, %s8
  %s11 = scalar_select 0, %s10, %s8
  // Predicated region
  $region2: #{actor_forward.1} parent=0 // pred_check
    _
  $region3: #{actor_forward.1} parent=0 // pred_check_branch
    %13 = sbr.rel (0) target = $region5
  $region4: #{actor_forward.1} parent=0 // pred_region
    _
  $region5: #{actor_forward.1} parent=0 // pred_fallthru
    _
  // Predicated region
  $region6: #{actor_forward.1} parent=0 // pred_check
    _
  $region7: #{actor_forward.1} parent=0 // pred_check_branch
    %15 = sbr.rel (0) target = $region9
  $region8: #{actor_forward.1} parent=0 // pred_region
    _
  $region9: #{actor_forward.1} parent=0 // pred_fallthru
    _
  // Predicated region
  $region10: #{actor_forward.1} parent=0 // pred_check
    _
  $region11: #{actor_forward.1} parent=0 // pred_check_branch
    %17 = sbr.rel (0) target = $region13
  $region12: #{actor_forward.1} parent=0 // pred_region
    _
  $region13: #{actor_forward.1} parent=0 // pred_fallthru
    _
  // Predicated region
  $region14: #{actor_forward.1} parent=0 // pred_check
    _
  $region15: #{actor_forward.1} parent=0 // pred_check_branch
    %19 = sbr.rel (0) target = $region17
  $region16: #{actor_forward.1} parent=0 // pred_region
    _
  $region17: #{actor_forward.1} parent=0 // pred_fallthru
    _
  // Predicated region
  $region18: #{actor_forward.1} parent=0 // pred_check
    _
  $region19: #{actor_forward.1} parent=0 // pred_check_branch
    %21 = sbr.rel (0) target = $region21
  $region20: #{actor_forward.1} parent=0 // pred_region
    _
  $region21: #{actor_forward.1} parent=0 // pred_fallthru
    _
  // Predicated region
  $region22: #{actor_forward.1} parent=0 // pred_check
    _
  $region23: #{actor_forward.1} parent=0 // pred_check_branch
    %23 = sbr.rel (0) target = $region25
  $region24: #{actor_forward.1} parent=0 // pred_region
    _
  $region25: #{actor_forward.1} parent=0 // pred_fallthru
    _
  // Predicated region
  $region26: #{actor_forward.1} parent=0 // pred_check
    _
  $region27: #{actor_forward.1} parent=0 // pred_check_branch
    %25 = sbr.rel (0) target = $region29
  $region28: #{actor_forward.1} parent=0 // pred_region
    _
  $region29: #{actor_forward.1} parent=0 // pred_fallthru
    _
  %v27 = vld [vmem:[%s0] sm:$0xf]
  %v28 = vld [vmem:[%s1] sm:$0xff]
  %v29 = vld [vmem:[%s1 + $0x8] sm:$0xff]
  %v30 = vld [vmem:[%s1 + $0x10] sm:$0xff]
  %v31 = vld [vmem:[%s1 + $0x18] sm:$0xff]
  %v32 = vld [vmem:[%s1 + $0x20] sm:$0xff]
  %v33 = vld [vmem:[%s1 + $0x28] sm:$0xff]
  %v34 = vld [vmem:[%s1 + $0x30] sm:$0xff]
  %v35 = vld [vmem:[%s1 + $0x38] sm:$0xff]
  %v36 = vld [vmem:[%s1 + $0x40] sm:$0xff]
  %v37 = vld [vmem:[%s1 + $0x48] sm:$0xff]
  %v38 = vld [vmem:[%s1 + $0x50] sm:$0xff]
  %v39 = vld [vmem:[%s1 + $0x58] sm:$0xff]
  %v40 = vld [vmem:[%s1 + $0x60] sm:$0xff]
  %v41 = vld [vmem:[%s1 + $0x68] sm:$0xff]
  %v42 = vld [vmem:[%s1 + $0x70] sm:$0xff]
  %v43 = vld [vmem:[%s1 + $0x78] sm:$0xff]
  %v44 = vld [vmem:[%s2] sm:$0x3]
  %v46 = vlaneseq
  %v47 = vshrl.u32 %v46, 7
  %v48 = vsub.s32 0, %v47
  %v49 = vrot.slane %v44, %v48
  %v50 = vlaneseq
  %v51 = vshrl.u32 %v50, 7
  %v52 = vsub.s32 1, %v51
  %v53 = vrot.slane %v44, %v52
  %v72 = vunpack.c.l.b16 %v28
  %v73 = vunpack.c.h.b16 %v28
  %v74 = vunpack.c.l.b16 %v29
  %v75 = vunpack.c.h.b16 %v29
  %v76 = vunpack.c.l.b16 %v30
  %v77 = vunpack.c.h.b16 %v30
  %v78 = vunpack.c.l.b16 %v31
  %v79 = vunpack.c.h.b16 %v31
  %v80 = vunpack.c.l.b16 %v32
  %v81 = vunpack.c.h.b16 %v32
  %v82 = vunpack.c.l.b16 %v33
  %v83 = vunpack.c.h.b16 %v33
  %v84 = vunpack.c.l.b16 %v34
  %v85 = vunpack.c.h.b16 %v34
  %v86 = vunpack.c.l.b16 %v35
  %v87 = vunpack.c.h.b16 %v35
  %v88 = vunpack.c.l.b16 %v36
  %v89 = vunpack.c.h.b16 %v36
  %v90 = vunpack.c.l.b16 %v37
  %v91 = vunpack.c.h.b16 %v37
  %v92 = vunpack.c.l.b16 %v38
  %v93 = vunpack.c.h.b16 %v38
  %v94 = vunpack.c.l.b16 %v39
  %v95 = vunpack.c.h.b16 %v39
  %v96 = vunpack.c.l.b16 %v40
  %v97 = vunpack.c.h.b16 %v40
  %v98 = vunpack.c.l.b16 %v41
  %v99 = vunpack.c.h.b16 %v41
  %v100 = vunpack.c.l.b16 %v42
  %v101 = vunpack.c.h.b16 %v42
  %v102 = vunpack.c.l.b16 %v43
  %v103 = vunpack.c.h.b16 %v43
  %v104 = vpack.c.b16 %v74, %v72
  %v105 = vpack.c.b16 %v75, %v73
  %v106 = vpack.c.b16 %v78, %v76
  %v107 = vpack.c.b16 %v79, %v77
  %v108 = vpack.c.b16 %v82, %v80
  %v109 = vpack.c.b16 %v83, %v81
  %v110 = vpack.c.b16 %v86, %v84
  %v111 = vpack.c.b16 %v87, %v85
  %v112 = vpack.c.b16 %v90, %v88
  %v113 = vpack.c.b16 %v91, %v89
  %v114 = vpack.c.b16 %v94, %v92
  %v115 = vpack.c.b16 %v95, %v93
  %v116 = vpack.c.b16 %v98, %v96
  %v117 = vpack.c.b16 %v99, %v97
  %v118 = vpack.c.b16 %v102, %v100
  %v119 = vpack.c.b16 %v103, %v101
  %136 = vmatprep.subr.bf16.mxu0 %v105
  %137 = vmatpush1.bf16.msra.mxu0 %v104
  %138 = vmatprep.subr.bf16.mxu0 %v107
  %139 = vmatpush1.bf16.msra.mxu0 %v106
  %140 = vmatprep.subr.bf16.mxu0 %v109
  %141 = vmatpush1.bf16.msra.mxu0 %v108
  %142 = vmatprep.subr.bf16.mxu0 %v111
  %143 = vmatpush1.bf16.msra.mxu0 %v110
  %144 = vmatprep.subr.bf16.mxu0 %v113
  %145 = vmatpush1.bf16.msra.mxu0 %v112
  %146 = vmatprep.subr.bf16.mxu0 %v115
  %147 = vmatpush1.bf16.msra.mxu0 %v114
  %148 = vmatprep.subr.bf16.mxu0 %v117
  %149 = vmatpush1.bf16.msra.mxu0 %v116
  %150 = vmatprep.subr.bf16.mxu0 %v119
  %151 = vmatpush1.bf16.msra.mxu0 %v118
  %152 = vmatprep.subr.bf16.mxu0 0
  %153 = vmatpush1.bf16.msra.mxu0 0
  %154 = vmatprep.subr.bf16.mxu0 0
  %155 = vmatpush1.bf16.msra.mxu0 0
  %156 = vmatprep.subr.bf16.mxu0 0
  %157 = vmatpush1.bf16.msra.mxu0 0
  %158 = vmatprep.subr.bf16.mxu0 0
  %159 = vmatpush1.bf16.msra.mxu0 0
  %160 = vmatprep.subr.bf16.mxu0 0
  %161 = vmatpush1.bf16.msra.mxu0 0
  %162 = vmatprep.subr.bf16.mxu0 0
  %163 = vmatpush1.bf16.msra.mxu0 0
  %164 = vmatprep.subr.bf16.mxu0 0
  %165 = vmatpush1.bf16.msra.mxu0 0
  %166 = vmatprep.subr.bf16.mxu0 0
  %167 = vmatpush1.bf16.msra.mxu0 0
  %168 = vmatprep.mubr.bf16.mxu0 0
  %169 = vmatmul.mubr.bf16.gmra.mrb[0].mxu0 %v27
  %v170 = vpop.f32.mrb[0].mxu0
  %v171 = vadd.f32 %v49, %v170
  %v172 = vpop.f32.mrb[0].mxu0
  %v173 = vadd.f32 %v53, %v172
  %v174 = vpop.f32.mrb[0].mxu0
  %v175 = vpop.f32.mrb[0].mxu0
  %176 = vdwg.mxu0
  %v177 = vmax.f32 %v171, 0.0
  %v178 = vmax.f32 %v173, 0.0
  %v179 = vpack.c.bf16 %v177, %v177
  %v180 = vpack.c.bf16 %v178, %v178
  %v181 = vld [vmem:[%s3] sm:$0xff]
  %v182 = vld [vmem:[%s3 + $0x8] sm:$0xff]
  %v183 = vld [vmem:[%s3 + $0x10] sm:$0xff]
  %v184 = vld [vmem:[%s3 + $0x18] sm:$0xff]
  %v185 = vld [vmem:[%s3 + $0x20] sm:$0xff]
  %v186 = vld [vmem:[%s3 + $0x28] sm:$0xff]
  %v187 = vld [vmem:[%s3 + $0x30] sm:$0xff]
  %v188 = vld [vmem:[%s3 + $0x38] sm:$0xff]
  %v189 = vld [vmem:[%s3 + $0x40] sm:$0xff]
  %v190 = vld [vmem:[%s3 + $0x48] sm:$0xff]
  %v191 = vld [vmem:[%s3 + $0x50] sm:$0xff]
  %v192 = vld [vmem:[%s3 + $0x58] sm:$0xff]
  %v193 = vld [vmem:[%s3 + $0x60] sm:$0xff]
  %v194 = vld [vmem:[%s3 + $0x68] sm:$0xff]
  %v195 = vld [vmem:[%s3 + $0x70] sm:$0xff]
  %v196 = vld [vmem:[%s3 + $0x78] sm:$0xff]
  %v197 = vld [vmem:[%s3 + $0x80] sm:$0xff]
  %v198 = vld [vmem:[%s3 + $0x88] sm:$0xff]
  %v199 = vld [vmem:[%s3 + $0x90] sm:$0xff]
  %v200 = vld [vmem:[%s3 + $0x98] sm:$0xff]
  %v201 = vld [vmem:[%s3 + $0xa0] sm:$0xff]
  %v202 = vld [vmem:[%s3 + $0xa8] sm:$0xff]
  %v203 = vld [vmem:[%s3 + $0xb0] sm:$0xff]
  %v204 = vld [vmem:[%s3 + $0xb8] sm:$0xff]
  %v205 = vld [vmem:[%s3 + $0xc0] sm:$0xff]
  %v206 = vld [vmem:[%s3 + $0xc8] sm:$0xff]
  %v207 = vld [vmem:[%s3 + $0xd0] sm:$0xff]
  %v208 = vld [vmem:[%s3 + $0xd8] sm:$0xff]
  %v209 = vld [vmem:[%s3 + $0xe0] sm:$0xff]
  %v210 = vld [vmem:[%s3 + $0xe8] sm:$0xff]
  %v211 = vld [vmem:[%s3 + $0xf0] sm:$0xff]
  %v212 = vld [vmem:[%s3 + $0xf8] sm:$0xff]
  %v213 = vld [vmem:[%s4] sm:$0x3]
  %v215 = vlaneseq
  %v216 = vshrl.u32 %v215, 7
  %v217 = vsub.s32 0, %v216
  %v218 = vrot.slane %v213, %v217
  %v219 = vlaneseq
  %v220 = vshrl.u32 %v219, 7
  %v221 = vsub.s32 1, %v220
  %v222 = vrot.slane %v213, %v221
  %v257 = vunpack.c.l.b16 %v181
  %v258 = vunpack.c.h.b16 %v181
  %v259 = vunpack.c.l.b16 %v182
  %v260 = vunpack.c.h.b16 %v182
  %v261 = vunpack.c.l.b16 %v183
  %v262 = vunpack.c.h.b16 %v183
  %v263 = vunpack.c.l.b16 %v184
  %v264 = vunpack.c.h.b16 %v184
  %v265 = vunpack.c.l.b16 %v185
  %v266 = vunpack.c.h.b16 %v185
  %v267 = vunpack.c.l.b16 %v186
  %v268 = vunpack.c.h.b16 %v186
  %v269 = vunpack.c.l.b16 %v187
  %v270 = vunpack.c.h.b16 %v187
  %v271 = vunpack.c.l.b16 %v188
  %v272 = vunpack.c.h.b16 %v188
  %v273 = vunpack.c.l.b16 %v189
  %v274 = vunpack.c.h.b16 %v189
  %v275 = vunpack.c.l.b16 %v190
  %v276 = vunpack.c.h.b16 %v190
  %v277 = vunpack.c.l.b16 %v191
  %v278 = vunpack.c.h.b16 %v191
  %v279 = vunpack.c.l.b16 %v192
  %v280 = vunpack.c.h.b16 %v192
  %v281 = vunpack.c.l.b16 %v193
  %v282 = vunpack.c.h.b16 %v193
  %v283 = vunpack.c.l.b16 %v194
  %v284 = vunpack.c.h.b16 %v194
  %v285 = vunpack.c.l.b16 %v195
  %v286 = vunpack.c.h.b16 %v195
  %v287 = vunpack.c.l.b16 %v196
  %v288 = vunpack.c.h.b16 %v196
  %v289 = vunpack.c.l.b16 %v197
  %v290 = vunpack.c.h.b16 %v197
  %v291 = vunpack.c.l.b16 %v198
  %v292 = vunpack.c.h.b16 %v198
  %v293 = vunpack.c.l.b16 %v199
  %v294 = vunpack.c.h.b16 %v199
  %v295 = vunpack.c.l.b16 %v200
  %v296 = vunpack.c.h.b16 %v200
  %v297 = vunpack.c.l.b16 %v201
  %v298 = vunpack.c.h.b16 %v201
  %v299 = vunpack.c.l.b16 %v202
  %v300 = vunpack.c.h.b16 %v202
  %v301 = vunpack.c.l.b16 %v203
  %v302 = vunpack.c.h.b16 %v203
  %v303 = vunpack.c.l.b16 %v204
  %v304 = vunpack.c.h.b16 %v204
  %v305 = vunpack.c.l.b16 %v205
  %v306 = vunpack.c.h.b16 %v205
  %v307 = vunpack.c.l.b16 %v206
  %v308 = vunpack.c.h.b16 %v206
  %v309 = vunpack.c.l.b16 %v207
  %v310 = vunpack.c.h.b16 %v207
  %v311 = vunpack.c.l.b16 %v208
  %v312 = vunpack.c.h.b16 %v208
  %v313 = vunpack.c.l.b16 %v209
  %v314 = vunpack.c.h.b16 %v209
  %v315 = vunpack.c.l.b16 %v210
  %v316 = vunpack.c.h.b16 %v210
  %v317 = vunpack.c.l.b16 %v211
  %v318 = vunpack.c.h.b16 %v211
  %v319 = vunpack.c.l.b16 %v212
  %v320 = vunpack.c.h.b16 %v212
  %v321 = vpack.c.b16 %v259, %v257
  %v322 = vpack.c.b16 %v260, %v258
  %v323 = vpack.c.b16 %v263, %v261
  %v324 = vpack.c.b16 %v264, %v262
  %v325 = vpack.c.b16 %v267, %v265
  %v326 = vpack.c.b16 %v268, %v266
  %v327 = vpack.c.b16 %v271, %v269
  %v328 = vpack.c.b16 %v272, %v270
  %v329 = vpack.c.b16 %v275, %v273
  %v330 = vpack.c.b16 %v276, %v274
  %v331 = vpack.c.b16 %v279, %v277
  %v332 = vpack.c.b16 %v280, %v278
  %v333 = vpack.c.b16 %v283, %v281
  %v334 = vpack.c.b16 %v284, %v282
  %v335 = vpack.c.b16 %v287, %v285
  %v336 = vpack.c.b16 %v288, %v286
  %v337 = vpack.c.b16 %v291, %v289
  %v338 = vpack.c.b16 %v292, %v290
  %v339 = vpack.c.b16 %v295, %v293
  %v340 = vpack.c.b16 %v296, %v294
  %v341 = vpack.c.b16 %v299, %v297
  %v342 = vpack.c.b16 %v300, %v298
  %v343 = vpack.c.b16 %v303, %v301
  %v344 = vpack.c.b16 %v304, %v302
  %v345 = vpack.c.b16 %v307, %v305
  %v346 = vpack.c.b16 %v308, %v306
  %v347 = vpack.c.b16 %v311, %v309
  %v348 = vpack.c.b16 %v312, %v310
  %v349 = vpack.c.b16 %v315, %v313
  %v350 = vpack.c.b16 %v316, %v314
  %v351 = vpack.c.b16 %v319, %v317
  %v352 = vpack.c.b16 %v320, %v318
  %385 = vmatprep.subr.bf16.mxu0 %v322
  %386 = vmatpush1.bf16.msra.mxu0 %v321
  %387 = vmatprep.subr.bf16.mxu0 %v324
  %388 = vmatpush1.bf16.msra.mxu0 %v323
  %389 = vmatprep.subr.bf16.mxu0 %v326
  %390 = vmatpush1.bf16.msra.mxu0 %v325
  %391 = vmatprep.subr.bf16.mxu0 %v328
  %392 = vmatpush1.bf16.msra.mxu0 %v327
  %393 = vmatprep.subr.bf16.mxu0 %v330
  %394 = vmatpush1.bf16.msra.mxu0 %v329
  %395 = vmatprep.subr.bf16.mxu0 %v332
  %396 = vmatpush1.bf16.msra.mxu0 %v331
  %397 = vmatprep.subr.bf16.mxu0 %v334
  %398 = vmatpush1.bf16.msra.mxu0 %v333
  %399 = vmatprep.subr.bf16.mxu0 %v336
  %400 = vmatpush1.bf16.msra.mxu0 %v335
  %401 = vmatprep.subr.bf16.mxu0 %v338
  %402 = vmatpush1.bf16.msra.mxu0 %v337
  %403 = vmatprep.subr.bf16.mxu0 %v340
  %404 = vmatpush1.bf16.msra.mxu0 %v339
  %405 = vmatprep.subr.bf16.mxu0 %v342
  %406 = vmatpush1.bf16.msra.mxu0 %v341
  %407 = vmatprep.subr.bf16.mxu0 %v344
  %408 = vmatpush1.bf16.msra.mxu0 %v343
  %409 = vmatprep.subr.bf16.mxu0 %v346
  %410 = vmatpush1.bf16.msra.mxu0 %v345
  %411 = vmatprep.subr.bf16.mxu0 %v348
  %412 = vmatpush1.bf16.msra.mxu0 %v347
  %413 = vmatprep.subr.bf16.mxu0 %v350
  %414 = vmatpush1.bf16.msra.mxu0 %v349
  %415 = vmatprep.subr.bf16.mxu0 %v352
  %416 = vmatpush1.bf16.msra.mxu0 %v351
  %417 = vmatprep.mubr.bf16.mxu0 %v180
  %418 = vmatmul.mubr.bf16.gmra.mrb[0].mxu0 %v179
  %v419 = vpop.f32.mrb[0].mxu0
  %v420 = vadd.f32 %v218, %v419
  %v421 = vpop.f32.mrb[0].mxu0
  %v422 = vadd.f32 %v222, %v421
  %v423 = vpop.f32.mrb[0].mxu0
  %v424 = vpop.f32.mrb[0].mxu0
  %425 = vdwg.mxu0
  %v426 = vmax.f32 %v420, 0.0
  %v427 = vmax.f32 %v422, 0.0
  %v428 = vpack.c.bf16 %v426, %v426
  %v429 = vpack.c.bf16 %v427, %v427
  %v430 = vld [vmem:[%s5] sm:$0xff]
  %v431 = vld [vmem:[%s5 + $0x8] sm:$0xff]
  %v432 = vld [vmem:[%s5 + $0x10] sm:$0xff]
  %v433 = vld [vmem:[%s5 + $0x18] sm:$0xff]
  %v434 = vld [vmem:[%s5 + $0x20] sm:$0xff]
  %v435 = vld [vmem:[%s5 + $0x28] sm:$0xff]
  %v436 = vld [vmem:[%s5 + $0x30] sm:$0xff]
  %v437 = vld [vmem:[%s5 + $0x38] sm:$0xff]
  %v438 = vld [vmem:[%s5 + $0x40] sm:$0xff]
  %v439 = vld [vmem:[%s5 + $0x48] sm:$0xff]
  %v440 = vld [vmem:[%s5 + $0x50] sm:$0xff]
  %v441 = vld [vmem:[%s5 + $0x58] sm:$0xff]
  %v442 = vld [vmem:[%s5 + $0x60] sm:$0xff]
  %v443 = vld [vmem:[%s5 + $0x68] sm:$0xff]
  %v444 = vld [vmem:[%s5 + $0x70] sm:$0xff]
  %v445 = vld [vmem:[%s5 + $0x78] sm:$0xff]
  %v446 = vld [vmem:[%s5 + $0x80] sm:$0xff]
  %v447 = vld [vmem:[%s5 + $0x88] sm:$0xff]
  %v448 = vld [vmem:[%s5 + $0x90] sm:$0xff]
  %v449 = vld [vmem:[%s5 + $0x98] sm:$0xff]
  %v450 = vld [vmem:[%s5 + $0xa0] sm:$0xff]
  %v451 = vld [vmem:[%s5 + $0xa8] sm:$0xff]
  %v452 = vld [vmem:[%s5 + $0xb0] sm:$0xff]
  %v453 = vld [vmem:[%s5 + $0xb8] sm:$0xff]
  %v454 = vld [vmem:[%s5 + $0xc0] sm:$0xff]
  %v455 = vld [vmem:[%s5 + $0xc8] sm:$0xff]
  %v456 = vld [vmem:[%s5 + $0xd0] sm:$0xff]
  %v457 = vld [vmem:[%s5 + $0xd8] sm:$0xff]
  %v458 = vld [vmem:[%s5 + $0xe0] sm:$0xff]
  %v459 = vld [vmem:[%s5 + $0xe8] sm:$0xff]
  %v460 = vld [vmem:[%s5 + $0xf0] sm:$0xff]
  %v461 = vld [vmem:[%s5 + $0xf8] sm:$0xff]
  %v462 = vld [vmem:[%s6] sm:$0x3]
  %v464 = vlaneseq
  %v465 = vshrl.u32 %v464, 7
  %v466 = vsub.s32 0, %v465
  %v467 = vrot.slane %v462, %v466
  %v468 = vlaneseq
  %v469 = vshrl.u32 %v468, 7
  %v470 = vsub.s32 1, %v469
  %v471 = vrot.slane %v462, %v470
  %v506 = vunpack.c.l.b16 %v430
  %v507 = vunpack.c.h.b16 %v430
  %v508 = vunpack.c.l.b16 %v431
  %v509 = vunpack.c.h.b16 %v431
  %v510 = vunpack.c.l.b16 %v432
  %v511 = vunpack.c.h.b16 %v432
  %v512 = vunpack.c.l.b16 %v433
  %v513 = vunpack.c.h.b16 %v433
  %v514 = vunpack.c.l.b16 %v434
  %v515 = vunpack.c.h.b16 %v434
  %v516 = vunpack.c.l.b16 %v435
  %v517 = vunpack.c.h.b16 %v435
  %v518 = vunpack.c.l.b16 %v436
  %v519 = vunpack.c.h.b16 %v436
  %v520 = vunpack.c.l.b16 %v437
  %v521 = vunpack.c.h.b16 %v437
  %v522 = vunpack.c.l.b16 %v438
  %v523 = vunpack.c.h.b16 %v438
  %v524 = vunpack.c.l.b16 %v439
  %v525 = vunpack.c.h.b16 %v439
  %v526 = vunpack.c.l.b16 %v440
  %v527 = vunpack.c.h.b16 %v440
  %v528 = vunpack.c.l.b16 %v441
  %v529 = vunpack.c.h.b16 %v441
  %v530 = vunpack.c.l.b16 %v442
  %v531 = vunpack.c.h.b16 %v442
  %v532 = vunpack.c.l.b16 %v443
  %v533 = vunpack.c.h.b16 %v443
  %v534 = vunpack.c.l.b16 %v444
  %v535 = vunpack.c.h.b16 %v444
  %v536 = vunpack.c.l.b16 %v445
  %v537 = vunpack.c.h.b16 %v445
  %v538 = vunpack.c.l.b16 %v446
  %v539 = vunpack.c.h.b16 %v446
  %v540 = vunpack.c.l.b16 %v447
  %v541 = vunpack.c.h.b16 %v447
  %v542 = vunpack.c.l.b16 %v448
  %v543 = vunpack.c.h.b16 %v448
  %v544 = vunpack.c.l.b16 %v449
  %v545 = vunpack.c.h.b16 %v449
  %v546 = vunpack.c.l.b16 %v450
  %v547 = vunpack.c.h.b16 %v450
  %v548 = vunpack.c.l.b16 %v451
  %v549 = vunpack.c.h.b16 %v451
  %v550 = vunpack.c.l.b16 %v452
  %v551 = vunpack.c.h.b16 %v452
  %v552 = vunpack.c.l.b16 %v453
  %v553 = vunpack.c.h.b16 %v453
  %v554 = vunpack.c.l.b16 %v454
  %v555 = vunpack.c.h.b16 %v454
  %v556 = vunpack.c.l.b16 %v455
  %v557 = vunpack.c.h.b16 %v455
  %v558 = vunpack.c.l.b16 %v456
  %v559 = vunpack.c.h.b16 %v456
  %v560 = vunpack.c.l.b16 %v457
  %v561 = vunpack.c.h.b16 %v457
  %v562 = vunpack.c.l.b16 %v458
  %v563 = vunpack.c.h.b16 %v458
  %v564 = vunpack.c.l.b16 %v459
  %v565 = vunpack.c.h.b16 %v459
  %v566 = vunpack.c.l.b16 %v460
  %v567 = vunpack.c.h.b16 %v460
  %v568 = vunpack.c.l.b16 %v461
  %v569 = vunpack.c.h.b16 %v461
  %v570 = vpack.c.b16 %v508, %v506
  %v571 = vpack.c.b16 %v509, %v507
  %v572 = vpack.c.b16 %v512, %v510
  %v573 = vpack.c.b16 %v513, %v511
  %v574 = vpack.c.b16 %v516, %v514
  %v575 = vpack.c.b16 %v517, %v515
  %v576 = vpack.c.b16 %v520, %v518
  %v577 = vpack.c.b16 %v521, %v519
  %v578 = vpack.c.b16 %v524, %v522
  %v579 = vpack.c.b16 %v525, %v523
  %v580 = vpack.c.b16 %v528, %v526
  %v581 = vpack.c.b16 %v529, %v527
  %v582 = vpack.c.b16 %v532, %v530
  %v583 = vpack.c.b16 %v533, %v531
  %v584 = vpack.c.b16 %v536, %v534
  %v585 = vpack.c.b16 %v537, %v535
  %v586 = vpack.c.b16 %v540, %v538
  %v587 = vpack.c.b16 %v541, %v539
  %v588 = vpack.c.b16 %v544, %v542
  %v589 = vpack.c.b16 %v545, %v543
  %v590 = vpack.c.b16 %v548, %v546
  %v591 = vpack.c.b16 %v549, %v547
  %v592 = vpack.c.b16 %v552, %v550
  %v593 = vpack.c.b16 %v553, %v551
  %v594 = vpack.c.b16 %v556, %v554
  %v595 = vpack.c.b16 %v557, %v555
  %v596 = vpack.c.b16 %v560, %v558
  %v597 = vpack.c.b16 %v561, %v559
  %v598 = vpack.c.b16 %v564, %v562
  %v599 = vpack.c.b16 %v565, %v563
  %v600 = vpack.c.b16 %v568, %v566
  %v601 = vpack.c.b16 %v569, %v567
  %634 = vmatprep.subr.bf16.mxu0 %v571
  %635 = vmatpush1.bf16.msra.mxu0 %v570
  %636 = vmatprep.subr.bf16.mxu0 %v573
  %637 = vmatpush1.bf16.msra.mxu0 %v572
  %638 = vmatprep.subr.bf16.mxu0 %v575
  %639 = vmatpush1.bf16.msra.mxu0 %v574
  %640 = vmatprep.subr.bf16.mxu0 %v577
  %641 = vmatpush1.bf16.msra.mxu0 %v576
  %642 = vmatprep.subr.bf16.mxu0 %v579
  %643 = vmatpush1.bf16.msra.mxu0 %v578
  %644 = vmatprep.subr.bf16.mxu0 %v581
  %645 = vmatpush1.bf16.msra.mxu0 %v580
  %646 = vmatprep.subr.bf16.mxu0 %v583
  %647 = vmatpush1.bf16.msra.mxu0 %v582
  %648 = vmatprep.subr.bf16.mxu0 %v585
  %649 = vmatpush1.bf16.msra.mxu0 %v584
  %650 = vmatprep.subr.bf16.mxu0 %v587
  %651 = vmatpush1.bf16.msra.mxu0 %v586
  %652 = vmatprep.subr.bf16.mxu0 %v589
  %653 = vmatpush1.bf16.msra.mxu0 %v588
  %654 = vmatprep.subr.bf16.mxu0 %v591
  %655 = vmatpush1.bf16.msra.mxu0 %v590
  %656 = vmatprep.subr.bf16.mxu0 %v593
  %657 = vmatpush1.bf16.msra.mxu0 %v592
  %658 = vmatprep.subr.bf16.mxu0 %v595
  %659 = vmatpush1.bf16.msra.mxu0 %v594
  %660 = vmatprep.subr.bf16.mxu0 %v597
  %661 = vmatpush1.bf16.msra.mxu0 %v596
  %662 = vmatprep.subr.bf16.mxu0 %v599
  %663 = vmatpush1.bf16.msra.mxu0 %v598
  %664 = vmatprep.subr.bf16.mxu0 %v601
  %665 = vmatpush1.bf16.msra.mxu0 %v600
  %666 = vmatprep.mubr.bf16.mxu0 %v429
  %667 = vmatmul.mubr.bf16.gmra.mrb[0].mxu0 %v428
  %v668 = vpop.f32.mrb[0].mxu0
  %v669 = vadd.f32 %v467, %v668
  %v670 = vpop.f32.mrb[0].mxu0
  %v671 = vadd.f32 %v471, %v670
  %v672 = vpop.f32.mrb[0].mxu0
  %v673 = vpop.f32.mrb[0].mxu0
  %674 = vdwg.mxu0
  %v675 = vtanh.pop %v671
  %v676 = vadd.f32 %v675, 1.0
  %v677 = vmul.f32 %v676, 3.5
  %v678 = vadd.f32 %v677, -5.0
  %679 = vst [vmem:[%s7] sm:$0xff] %v669
  %680 = vst [vmem:[%s7 + $0x8] sm:$0xff] %v678
  // Predicated region
  $region30: #{actor_forward.1} parent=0 // pred_check
    _
  $region31: #{actor_forward.1} parent=0 // pred_check_branch
    %682 = sbr.rel (0) target = $region33
  $region32: #{actor_forward.1} parent=0 // pred_region
    _
  $region33: #{actor_forward.1} parent=0 // pred_fallthru
    _
  // Predicated region
  $region34: #{actor_forward.1} parent=0 // pred_check
    _
  $region35: #{actor_forward.1} parent=0 // pred_check_branch
    %684 = sbr.rel (0) target = $region37
  $region36: #{actor_forward.1} parent=0 // pred_region
    _
  $region37: #{actor_forward.1} parent=0 // pred_fallthru
    _

</llo_original>
